<compile_context>
chip_gen: v7x
topology: tpu7x:2x2x1
jax: 0.10.0
libtpu: 0.0.40
codegen_flags: <defaults>
</compile_context>

<pallas_src>
import jax
import jax.numpy as jnp
from jax.experimental import pallas as pl
from jax.experimental.pallas import tpu as pltpu

INPUT_SIZE = 1280
HIDDEN1 = 256
HIDDEN2 = 128
NUM_CLASSES = 7
NUM_CLASSES_PADDED = 8  # pad final output dim to 8 (full-array last dim), slice later


def _round_up(n, m):
    return ((n + m - 1) // m) * m


def _cdiv(a, b):
    return -(-a // b)


def _num_tensorcores():
    """Best-effort TensorCore count of device 0 (v7x megacore => 2)."""
    try:
        d = jax.devices()[0]
        return int(getattr(d, "num_cores", 1) or 1)
    except Exception:
        return 1


def mlp_kernel(x_ref, w1_ref, b1_ref, w2_ref, b2_ref, w3_ref, b3_ref, o_ref):
    # Cast streamed activations to bf16 inside the kernel (no wrapper-side cast,
    # so no extra HBM round trip). Every dot accumulates in f32 on the MXU.
    xb = x_ref[...].astype(jnp.bfloat16)
    # Layer 1: Linear(1280 -> 256) + ReLU.
    h1 = jnp.dot(xb, w1_ref[...], preferred_element_type=jnp.float32)
    h1 = jnp.maximum(h1 + b1_ref[...], 0.0)
    # Dropout(0.3): identity at inference time.
    # Layer 2: Linear(256 -> 128) + ReLU.
    h2 = jnp.dot(h1.astype(jnp.bfloat16), w2_ref[...],
                 preferred_element_type=jnp.float32)
    h2 = jnp.maximum(h2 + b2_ref[...], 0.0)
    # Layer 3: Linear(128 -> 7), computed on an 8-wide zero-padded output.
    out = jnp.dot(h2.astype(jnp.bfloat16), w3_ref[...],
                  preferred_element_type=jnp.float32)
    o_ref[...] = (out + b3_ref[...]).astype(o_ref.dtype)


def prepare_params(raw_params):
    """One-time param prep: weights -> bf16, layer-3 zero-padded to 8 columns.

    raw_params = (w1, b1, w2, b2, w3, b3), stored as (in_features, out_features)
    f32 arrays (i.e. transposed relative to PyTorch's Linear.weight).
    """
    w1, b1, w2, b2, w3, b3 = raw_params
    w3p = jnp.zeros((HIDDEN2, NUM_CLASSES_PADDED), jnp.float32).at[:, :NUM_CLASSES].set(w3)
    b3p = jnp.zeros((1, NUM_CLASSES_PADDED), jnp.float32).at[:, :NUM_CLASSES].set(
        b3.reshape(1, NUM_CLASSES))
    return (w1.astype(jnp.bfloat16),
            b1.reshape(1, HIDDEN1).astype(jnp.float32),
            w2.astype(jnp.bfloat16),
            b2.reshape(1, HIDDEN2).astype(jnp.float32),
            w3p.astype(jnp.bfloat16),
            b3p)


def emotion_classifier_forward(x, prepared_params, *, batch_tile=1024):
    """x: (B, 1280) float32 or bfloat16. Returns logits (B, 7) float32."""
    w1b, b1, w2b, b2, w3b, b3p = prepared_params
    B = x.shape[0]
    x_bytes = jnp.dtype(x.dtype).itemsize

    # --- batch tiling: pad only to a multiple of 8, then balance the tiles ---
    B8 = _round_up(B, 8)
    bt_cap = max(8, _round_up(min(batch_tile, B8), 8))   # multiple of 8 defensively
    nsteps = _cdiv(B8, bt_cap)
    # v7x megacore: a single-step grid would leave one of the two TensorCores
    # idle; split when there is enough work. Gated off on v5e/v6e (1 TC).
    if _num_tensorcores() >= 2 and B8 >= 16 and nsteps == 1:
        nsteps = 2
    # TODO(synk): optionally force an even step count on multi-core parts when it
    #             does not increase row padding (skipped: can cost more HBM than
    #             the load balance saves).
    bt = max(8, _round_up(_cdiv(B8, nsteps), 8))
    Bp = _round_up(B8, bt)
    if Bp != B:
        x = jnp.pad(x, ((0, Bp - B), (0, 0)))
    grid = (Bp // bt,)

    # Constant index_map => weights/biases stay VMEM-resident across grid steps.
    full = lambda shape: pl.BlockSpec(shape, lambda i: tuple(0 for _ in shape))

    n_weight_elems = (INPUT_SIZE * HIDDEN1 + HIDDEN1 * HIDDEN2
                      + HIDDEN2 * NUM_CLASSES_PADDED)
    n_bias_elems = HIDDEN1 + HIDDEN2 + NUM_CLASSES_PADDED
    cost = pl.CostEstimate(
        flops=2 * Bp * n_weight_elems,
        transcendentals=0,
        bytes_accessed=(Bp * INPUT_SIZE * x_bytes          # x (native dtype)
                        + n_weight_elems * 2               # weights (bf16)
                        + n_bias_elems * 4                 # biases (f32)
                        + Bp * NUM_CLASSES_PADDED * 4),    # output (f32, 8 wide)
    )

    # Scoped-VMEM budget: double-buffered x + double-buffered out + resident
    # weights/biases + in-kernel temporaries, with ~1.5x headroom.
    vmem_needed = (2 * bt * INPUT_SIZE * x_bytes
                   + 2 * bt * NUM_CLASSES_PADDED * 4
                   + n_weight_elems * 2 + n_bias_elems * 4
                   + bt * (INPUT_SIZE * 2 + HIDDEN1 * 6 + HIDDEN2 * 6))
    vmem_limit = int(min(max(vmem_needed * 3 // 2, 32 << 20), 56 << 20))

    out_padded = pl.pallas_call(
        mlp_kernel,
        out_shape=jax.ShapeDtypeStruct((Bp, NUM_CLASSES_PADDED), jnp.float32),
        grid_spec=pltpu.PrefetchScalarGridSpec(
            num_scalar_prefetch=0,
            grid=grid,
            in_specs=[
                pl.BlockSpec((bt, INPUT_SIZE), lambda i: (i, 0)),
                full((INPUT_SIZE, HIDDEN1)),
                full((1, HIDDEN1)),
                full((HIDDEN1, HIDDEN2)),
                full((1, HIDDEN2)),
                full((HIDDEN2, NUM_CLASSES_PADDED)),
                full((1, NUM_CLASSES_PADDED)),
            ],
            out_specs=pl.BlockSpec((bt, NUM_CLASSES_PADDED), lambda i: (i, 0)),
        ),
        compiler_params=pltpu.CompilerParams(
            dimension_semantics=("parallel",),
            vmem_limit_bytes=vmem_limit,
        ),
        cost_estimate=cost,
    )(x, w1b, b1, w2b, b2, w3b, b3p)

    return out_padded[:B, :NUM_CLASSES]


def init_params(key):
    """Deterministic synthetic init matching nn.Linear shapes (stored as (in, out))."""
    k1, k2, k3, k4, k5, k6 = jax.random.split(key, 6)
    w1 = jax.random.normal(k1, (INPUT_SIZE, HIDDEN1), jnp.float32) * (1.0 / INPUT_SIZE) ** 0.5
    b1 = jax.random.normal(k2, (1, HIDDEN1), jnp.float32) * 0.01
    w2 = jax.random.normal(k3, (HIDDEN1, HIDDEN2), jnp.float32) * (1.0 / HIDDEN1) ** 0.5
    b2 = jax.random.normal(k4, (1, HIDDEN2), jnp.float32) * 0.01
    w3 = jax.random.normal(k5, (HIDDEN2, NUM_CLASSES), jnp.float32) * (1.0 / HIDDEN2) ** 0.5
    b3 = jax.random.normal(k6, (1, NUM_CLASSES), jnp.float32) * 0.01
    return (w1, b1, w2, b2, w3, b3)


def reference_forward(x, raw_params):
    """Pure-JAX reference mirroring the kernel's bf16-operand / f32-accumulate recipe.

    Note: bf16 MXU operands introduce ~1e-2 relative error vs a pure-f32 model;
    acceptable for classification logits.
    """
    w1, b1, w2, b2, w3, b3 = raw_params
    bf = lambda a: a.astype(jnp.bfloat16).astype(jnp.float32)
    h1 = jnp.maximum(bf(x) @ bf(w1) + b1, 0.0)
    h2 = jnp.maximum(bf(h1) @ bf(w2) + b2, 0.0)
    return bf(h2) @ bf(w3) + b3


if __name__ == "__main__":
    key = jax.random.PRNGKey(0)
    kx, kp = jax.random.split(key)
    raw_params = init_params(kp)
    prepared_params = prepare_params(raw_params)   # one-time bf16 cast + padding

    # Small shapes: tile-aligned batch, ragged batch (exercises 8-row padding),
    # and a small multi-step grid (exercises tile balancing), all at B <= 40.
    cases = [(8, {}), (10, {}), (40, {"batch_tile": 16})]
    for B, kwargs in cases:
        x = jax.random.normal(jax.random.fold_in(kx, B), (B, INPUT_SIZE), jnp.float32)

        logits = emotion_classifier_forward(x, prepared_params, **kwargs)
        logits = jax.block_until_ready(logits)

        ref = reference_forward(x, raw_params)
        assert logits.shape == (B, NUM_CLASSES)
        assert jnp.allclose(logits, ref, atol=2e-2, rtol=2e-2), f"mismatch vs reference (B={B})"

    print("KERNEL_OK")
</pallas_src>

<mosaic_0001>
module attributes {stable_mosaic.version = 11 : i64} {
  func.func @mlp_kernel(%arg0: i32, %arg1: memref<8x1280xf32, #tpu.memory_space<vmem>>, %arg2: memref<1280x256xbf16, #tpu.memory_space<vmem>>, %arg3: memref<1x256xf32, #tpu.memory_space<vmem>>, %arg4: memref<256x128xbf16, #tpu.memory_space<vmem>>, %arg5: memref<1x128xf32, #tpu.memory_space<vmem>>, %arg6: memref<128x8xbf16, #tpu.memory_space<vmem>>, %arg7: memref<1x8xf32, #tpu.memory_space<vmem>>, %arg8: memref<8x8xf32, #tpu.memory_space<vmem>>) attributes {dimension_semantics = [#tpu.dimension_semantics<parallel>], iteration_bounds = array<i64: 1>, scalar_prefetch = 0 : i64, scratch_operands = 0 : i64, tpu.core_type = #tpu.core_type<tc>, window_params = [{transform_indices = @transform_0, window_bounds = array<i64: 8, 1280>}, {pipeline_mode = #tpu.pipeline_mode<synchronous>, transform_indices = @transform_1, window_bounds = array<i64: 1280, 256>}, {pipeline_mode = #tpu.pipeline_mode<synchronous>, transform_indices = @transform_2, window_bounds = array<i64: 1, 256>}, {pipeline_mode = #tpu.pipeline_mode<synchronous>, transform_indices = @transform_3, window_bounds = array<i64: 256, 128>}, {pipeline_mode = #tpu.pipeline_mode<synchronous>, transform_indices = @transform_4, window_bounds = array<i64: 1, 128>}, {pipeline_mode = #tpu.pipeline_mode<synchronous>, transform_indices = @transform_5, window_bounds = array<i64: 128, 8>}, {pipeline_mode = #tpu.pipeline_mode<synchronous>, transform_indices = @transform_6, window_bounds = array<i64: 1, 8>}, {transform_indices = @transform_7, window_bounds = array<i64: 8, 8>}]} {
    %c0 = arith.constant 0 : index
    %c0_0 = arith.constant 0 : index
    %0 = vector.load %arg1[%c0, %c0_0] : memref<8x1280xf32, #tpu.memory_space<vmem>>, vector<8x1280xf32>
    %1 = arith.truncf %0 : vector<8x1280xf32> to vector<8x1280xbf16>
    %c0_1 = arith.constant 0 : index
    %c0_2 = arith.constant 0 : index
    %2 = vector.load %arg2[%c0_1, %c0_2] : memref<1280x256xbf16, #tpu.memory_space<vmem>>, vector<1280x256xbf16>
    %cst = arith.constant dense<0.000000e+00> : vector<8x256xf32>
    %3 = tpu.matmul %1, %2, %cst {dimension_numbers = #tpu.dot_dimension_numbers<[1], [0], [0], [1], [0, 0, 1, 1], [], []>} : vector<8x1280xbf16>, vector<1280x256xbf16>, vector<8x256xf32> -> vector<8x256xf32>
    %c0_3 = arith.constant 0 : index
    %c0_4 = arith.constant 0 : index
    %4 = vector.load %arg3[%c0_3, %c0_4] : memref<1x256xf32, #tpu.memory_space<vmem>>, vector<1x256xf32>
    %5 = vector.broadcast %4 : vector<1x256xf32> to vector<8x256xf32>
    %6 = arith.addf %3, %5 : vector<8x256xf32>
    %cst_5 = arith.constant 0.000000e+00 : f32
    %7 = vector.broadcast %cst_5 : f32 to vector<8x256xf32>
    %8 = arith.maximumf %6, %7 : vector<8x256xf32>
    %9 = arith.truncf %8 : vector<8x256xf32> to vector<8x256xbf16>
    %c0_6 = arith.constant 0 : index
    %c0_7 = arith.constant 0 : index
    %10 = vector.load %arg4[%c0_6, %c0_7] : memref<256x128xbf16, #tpu.memory_space<vmem>>, vector<256x128xbf16>
    %cst_8 = arith.constant dense<0.000000e+00> : vector<8x128xf32>
    %11 = tpu.matmul %9, %10, %cst_8 {dimension_numbers = #tpu.dot_dimension_numbers<[1], [0], [0], [1], [0, 0, 1, 1], [], []>} : vector<8x256xbf16>, vector<256x128xbf16>, vector<8x128xf32> -> vector<8x128xf32>
    %c0_9 = arith.constant 0 : index
    %c0_10 = arith.constant 0 : index
    %12 = vector.load %arg5[%c0_9, %c0_10] : memref<1x128xf32, #tpu.memory_space<vmem>>, vector<1x128xf32>
    %13 = vector.broadcast %12 : vector<1x128xf32> to vector<8x128xf32>
    %14 = arith.addf %11, %13 : vector<8x128xf32>
    %cst_11 = arith.constant 0.000000e+00 : f32
    %15 = vector.broadcast %cst_11 : f32 to vector<8x128xf32>
    %16 = arith.maximumf %14, %15 : vector<8x128xf32>
    %17 = arith.truncf %16 : vector<8x128xf32> to vector<8x128xbf16>
    %c0_12 = arith.constant 0 : index
    %c0_13 = arith.constant 0 : index
    %18 = vector.load %arg6[%c0_12, %c0_13] : memref<128x8xbf16, #tpu.memory_space<vmem>>, vector<128x8xbf16>
    %cst_14 = arith.constant dense<0.000000e+00> : vector<8x8xf32>
    %19 = tpu.matmul %17, %18, %cst_14 {dimension_numbers = #tpu.dot_dimension_numbers<[1], [0], [0], [1], [0, 0, 1, 1], [], []>} : vector<8x128xbf16>, vector<128x8xbf16>, vector<8x8xf32> -> vector<8x8xf32>
    %c0_15 = arith.constant 0 : index
    %c0_16 = arith.constant 0 : index
    %20 = vector.load %arg7[%c0_15, %c0_16] : memref<1x8xf32, #tpu.memory_space<vmem>>, vector<1x8xf32>
    %21 = vector.broadcast %20 : vector<1x8xf32> to vector<8x8xf32>
    %22 = arith.addf %19, %21 : vector<8x8xf32>
    %c0_17 = arith.constant 0 : index
    %c0_18 = arith.constant 0 : index
    %23 = vector.load %arg8[%c0_17, %c0_18] : memref<8x8xf32, #tpu.memory_space<vmem>>, vector<8x8xf32>
    tpu.vector_store %arg8[%c0_17, %c0_18], %22 {strides = array<i32>} : memref<8x8xf32, #tpu.memory_space<vmem>>, vector<8x8xf32>,
    return
  }
  func.func @transform_0(%arg0: i32) -> (i32, i32) {
    %c0_i32 = arith.constant 0 : i32
    %c0_i32_0 = arith.constant 0 : i32
    return %arg0, %c0_i32 : i32, i32
  }
  func.func @transform_1(%arg0: i32) -> (i32, i32) {
    %c0_i32 = arith.constant 0 : i32
    %c0_i32_0 = arith.constant 0 : i32
    %c0_i32_1 = arith.constant 0 : i32
    return %c0_i32, %c0_i32_0 : i32, i32
  }
  func.func @transform_2(%arg0: i32) -> (i32, i32) {
    %c0_i32 = arith.constant 0 : i32
    %c0_i32_0 = arith.constant 0 : i32
    %c0_i32_1 = arith.constant 0 : i32
    return %c0_i32, %c0_i32_0 : i32, i32
  }
  func.func @transform_3(%arg0: i32) -> (i32, i32) {
    %c0_i32 = arith.constant 0 : i32
    %c0_i32_0 = arith.constant 0 : i32
    %c0_i32_1 = arith.constant 0 : i32
    return %c0_i32, %c0_i32_0 : i32, i32
  }
  func.func @transform_4(%arg0: i32) -> (i32, i32) {
    %c0_i32 = arith.constant 0 : i32
    %c0_i32_0 = arith.constant 0 : i32
    %c0_i32_1 = arith.constant 0 : i32
    return %c0_i32, %c0_i32_0 : i32, i32
  }
  func.func @transform_5(%arg0: i32) -> (i32, i32) {
    %c0_i32 = arith.constant 0 : i32
    %c0_i32_0 = arith.constant 0 : i32
    %c0_i32_1 = arith.constant 0 : i32
    return %c0_i32, %c0_i32_0 : i32, i32
  }
  func.func @transform_6(%arg0: i32) -> (i32, i32) {
    %c0_i32 = arith.constant 0 : i32
    %c0_i32_0 = arith.constant 0 : i32
    %c0_i32_1 = arith.constant 0 : i32
    return %c0_i32, %c0_i32_0 : i32, i32
  }
  func.func @transform_7(%arg0: i32) -> (i32, i32) {
    %c0_i32 = arith.constant 0 : i32
    %c0_i32_0 = arith.constant 0 : i32
    return %arg0, %c0_i32 : i32, i32
  }
}

</mosaic_0001>

<llo_original>
// kernel: tpu_custom_call.1
$region0: #{tpu_custom_call.1}
  #allocation0 [shape = 'u32[]', space=smem, size = 0x4, offset = 0x4, fixed_abs, tag = 'smem constant byte address 0x4 - core index']
  #allocation1 [shape = 'u32[144,128]{1,0:T(1,128)}', space=vmem, size = 0x12000, scoped, tag = 'internal scratch']
  %s0 = inlined_call_operand.hbm [shape: f32[8,1280], index: 0, kind: input, shape index: {}]
  %s1 = inlined_call_operand.hbm [shape: bf16[1280,256], index: 1, kind: input, shape index: {}]
  %s2 = inlined_call_operand.vmem [shape: f32[1,256], index: 2, kind: input, shape index: {}]
  %s3 = inlined_call_operand.hbm [shape: bf16[256,128], index: 3, kind: input, shape index: {}]
  %s4 = inlined_call_operand.vmem [shape: f32[1,128], index: 4, kind: input, shape index: {}]
  %s5 = inlined_call_operand.vmem [shape: bf16[128,8], index: 5, kind: input, shape index: {}]
  %s6 = inlined_call_operand.vmem [shape: f32[1,8], index: 6, kind: input, shape index: {}]
  %s7 = inlined_call_operand.hbm [shape: f32[8,8], index: 7, kind: output, shape index: {}]
  %s8 = sld [smem:[#allocation0]]
  $region50: #{tpu_custom_call.1} parent=0
    _
  %s10 = ssub.s32 1, %s8
  %s11 = scalar_select 0, %s10, %s8
  $region1: #{tpu_custom_call.1} parent=0
    #allocation2 [shape = 'u8[40960]{0}', space=vmem, size = 0xa000, scoped, tag = 'input window, operand 0, single buffered']
    #allocation3 [shape = 's32[1]{0}', space=sflag, size = 0x4, scoped, tag = 'scoped memory for tpu_custom_call.1']
    #allocation4 [shape = 's32[1]{0}', space=sflag, size = 0x4, scoped, tag = 'scoped memory for tpu_custom_call.1']
    #allocation5 [shape = 'u8[655360]{0}', space=vmem, size = 0xa0000, scoped, tag = 'input window, operand 1, single buffered']
    #allocation6 [shape = 's32[1]{0}', space=sflag, size = 0x4, scoped, tag = 'scoped memory for tpu_custom_call.1']
    #allocation7 [shape = 'u8[65536]{0}', space=vmem, size = 0x10000, scoped, tag = 'input window, operand 3, single buffered']
    #allocation8 [shape = 'u8[4096]{0}', space=vmem, size = 0x1000, scoped, tag = 'output window, operand 0, single buffered']
    %12 = vsyncpa [#allocation3], 0
    %13 = vsyncpa [#allocation6], 0
    %14 = vsyncpa [#allocation4], 0
    // Predicated region
    $region2: #{tpu_custom_call.1} parent=1 // pred_check
      _
    $region3: #{tpu_custom_call.1} parent=1 // pred_check_branch
      %16 = sbr.rel (0) target = $region5
    $region4: #{tpu_custom_call.1} parent=1 // pred_region
      %s18 = ssub.s32 1280, 1280
      %19 = vsyncadd [#allocation3], %s18
      %s21 = sshll.u32 [#allocation2], 4
      %s22 = int_to_ptr.vmem [resolvable:$true] %s21
      %24 = dma.hbm_to_vmem [thread:$0]  %s0, 1280, %s22, [#allocation3]
    $region5: #{tpu_custom_call.1} parent=1 // pred_fallthru
      _
    // Predicated region
    $region6: #{tpu_custom_call.1} parent=1 // pred_check
      _
    $region7: #{tpu_custom_call.1} parent=1 // pred_check_branch
      %26 = sbr.rel (0) target = $region9
    $region8: #{tpu_custom_call.1} parent=1 // pred_region
      %s28 = ssub.s32 20480, 20480
      %29 = vsyncadd [#allocation6], %s28
      %s30 = sshll.u32 [#allocation5], 4
      %s31 = int_to_ptr.vmem [resolvable:$true] %s30
      %36 = dma.hbm_to_vmem [thread:$0]  %s1, 20480, %s31, [#allocation6], 128, 128, 8
    $region9: #{tpu_custom_call.1} parent=1 // pred_fallthru
      _
    // Predicated region
    $region10: #{tpu_custom_call.1} parent=1 // pred_check
      _
    $region11: #{tpu_custom_call.1} parent=1 // pred_check_branch
      %38 = sbr.rel (0) target = $region13
    $region12: #{tpu_custom_call.1} parent=1 // pred_region
      _
    $region13: #{tpu_custom_call.1} parent=1 // pred_fallthru
      _
    // Predicated region
    $region14: #{tpu_custom_call.1} parent=1 // pred_check
      _
    $region15: #{tpu_custom_call.1} parent=1 // pred_check_branch
      %40 = sbr.rel (0) target = $region17
    $region16: #{tpu_custom_call.1} parent=1 // pred_region
      %s42 = ssub.s32 2048, 2048
      %43 = vsyncadd [#allocation6], %s42
      %s44 = sshll.u32 [#allocation7], 4
      %s45 = int_to_ptr.vmem [resolvable:$true] %s44
      %50 = dma.hbm_to_vmem [thread:$0]  %s3, 2048, %s45, [#allocation6], 64, 64, 4
    $region17: #{tpu_custom_call.1} parent=1 // pred_fallthru
      _
    // Predicated region
    $region18: #{tpu_custom_call.1} parent=1 // pred_check
      _
    $region19: #{tpu_custom_call.1} parent=1 // pred_check_branch
      %52 = sbr.rel (0) target = $region21
    $region20: #{tpu_custom_call.1} parent=1 // pred_region
      _
    $region21: #{tpu_custom_call.1} parent=1 // pred_fallthru
      _
    // Predicated region
    $region22: #{tpu_custom_call.1} parent=1 // pred_check
      _
    $region23: #{tpu_custom_call.1} parent=1 // pred_check_branch
      %54 = sbr.rel (0) target = $region25
    $region24: #{tpu_custom_call.1} parent=1 // pred_region
      _
    $region25: #{tpu_custom_call.1} parent=1 // pred_fallthru
      _
    // Predicated region
    $region26: #{tpu_custom_call.1} parent=1 // pred_check
      _
    $region27: #{tpu_custom_call.1} parent=1 // pred_check_branch
      %56 = sbr.rel (0) target = $region29
    $region28: #{tpu_custom_call.1} parent=1 // pred_region
      _
    $region29: #{tpu_custom_call.1} parent=1 // pred_fallthru
      _
    // Predicated region
    $region30: #{tpu_custom_call.1} parent=1 // pred_check
      _
    $region31: #{tpu_custom_call.1} parent=1 // pred_check_branch
      %58 = sbr.rel (0) target = $region33
    $region32: #{tpu_custom_call.1} parent=1 // pred_region
      %59 = dma.done [#allocation3], 1280
    $region33: #{tpu_custom_call.1} parent=1 // pred_fallthru
      _
    // Predicated region
    $region34: #{tpu_custom_call.1} parent=1 // pred_check
      _
    $region35: #{tpu_custom_call.1} parent=1 // pred_check_branch
      %61 = sbr.rel (0) target = $region37
    $region36: #{tpu_custom_call.1} parent=1 // pred_region
      %62 = dma.done [#allocation6], 20480
    $region37: #{tpu_custom_call.1} parent=1 // pred_fallthru
      _
    // Predicated region
    $region38: #{tpu_custom_call.1} parent=1 // pred_check
      _
    $region39: #{tpu_custom_call.1} parent=1 // pred_check_branch
      %64 = sbr.rel (0) target = $region41
    $region40: #{tpu_custom_call.1} parent=1 // pred_region
      %65 = dma.done [#allocation6], 2048
    $region41: #{tpu_custom_call.1} parent=1 // pred_fallthru
      _
    %v67 = vld [vmem:[#allocation2] sm:$0xff]
    %v68 = vld [vmem:[#allocation2 + $0x8] sm:$0xff]
    %v69 = vld [vmem:[#allocation2 + $0x10] sm:$0xff]
    %v70 = vld [vmem:[#allocation2 + $0x18] sm:$0xff]
    %v71 = vld [vmem:[#allocation2 + $0x20] sm:$0xff]
    %v72 = vld [vmem:[#allocation2 + $0x28] sm:$0xff]
    %v73 = vld [vmem:[#allocation2 + $0x30] sm:$0xff]
    %v74 = vld [vmem:[#allocation2 + $0x38] sm:$0xff]
    %v75 = vld [vmem:[#allocation2 + $0x40] sm:$0xff]
    %v76 = vld [vmem:[#allocation2 + $0x48] sm:$0xff]
    %v77 = vpack.c.bf16 %v67, %v67
    %v78 = vpack.c.bf16 %v68, %v68
    %v79 = vpack.c.bf16 %v69, %v69
    %v80 = vpack.c.bf16 %v70, %v70
    %v81 = vpack.c.bf16 %v71, %v71
    %v82 = vpack.c.bf16 %v72, %v72
    %v83 = vpack.c.bf16 %v73, %v73
    %v84 = vpack.c.bf16 %v74, %v74
    %v85 = vpack.c.bf16 %v75, %v75
    %v86 = vpack.c.bf16 %v76, %v76
    %v87 = vld [vmem:[#allocation5] sm:$0xff]
    %v88 = vld [vmem:[#allocation5 + $0x8] sm:$0xff]
    %v89 = vld [vmem:[#allocation5 + $0x10] sm:$0xff]
    %v90 = vld [vmem:[#allocation5 + $0x18] sm:$0xff]
    %v91 = vld [vmem:[#allocation5 + $0x20] sm:$0xff]
    %v92 = vld [vmem:[#allocation5 + $0x28] sm:$0xff]
    %v93 = vld [vmem:[#allocation5 + $0x30] sm:$0xff]
    %v94 = vld [vmem:[#allocation5 + $0x38] sm:$0xff]
    %v95 = vld [vmem:[#allocation5 + $0x40] sm:$0xff]
    %v96 = vld [vmem:[#allocation5 + $0x48] sm:$0xff]
    %v97 = vld [vmem:[#allocation5 + $0x50] sm:$0xff]
    %v98 = vld [vmem:[#allocation5 + $0x58] sm:$0xff]
    %v99 = vld [vmem:[#allocation5 + $0x60] sm:$0xff]
    %v100 = vld [vmem:[#allocation5 + $0x68] sm:$0xff]
    %v101 = vld [vmem:[#allocation5 + $0x70] sm:$0xff]
    %v102 = vld [vmem:[#allocation5 + $0x78] sm:$0xff]
    %v103 = vld [vmem:[#allocation5 + $0x80] sm:$0xff]
    %v104 = vld [vmem:[#allocation5 + $0x88] sm:$0xff]
    %v105 = vld [vmem:[#allocation5 + $0x90] sm:$0xff]
    %v106 = vld [vmem:[#allocation5 + $0x98] sm:$0xff]
    %v107 = vld [vmem:[#allocation5 + $0xa0] sm:$0xff]
    %v108 = vld [vmem:[#allocation5 + $0xa8] sm:$0xff]
    %v109 = vld [vmem:[#allocation5 + $0xb0] sm:$0xff]
    %v110 = vld [vmem:[#allocation5 + $0xb8] sm:$0xff]
    %v111 = vld [vmem:[#allocation5 + $0xc0] sm:$0xff]
    %v112 = vld [vmem:[#allocation5 + $0xc8] sm:$0xff]
    %v113 = vld [vmem:[#allocation5 + $0xd0] sm:$0xff]
    %v114 = vld [vmem:[#allocation5 + $0xd8] sm:$0xff]
    %v115 = vld [vmem:[#allocation5 + $0xe0] sm:$0xff]
    %v116 = vld [vmem:[#allocation5 + $0xe8] sm:$0xff]
    %v117 = vld [vmem:[#allocation5 + $0xf0] sm:$0xff]
    %v118 = vld [vmem:[#allocation5 + $0xf8] sm:$0xff]
    %v119 = vld [vmem:[#allocation5 + $0x100] sm:$0xff]
    %v120 = vld [vmem:[#allocation5 + $0x108] sm:$0xff]
    %v121 = vld [vmem:[#allocation5 + $0x110] sm:$0xff]
    %v122 = vld [vmem:[#allocation5 + $0x118] sm:$0xff]
    %v123 = vld [vmem:[#allocation5 + $0x120] sm:$0xff]
    %v124 = vld [vmem:[#allocation5 + $0x128] sm:$0xff]
    %v125 = vld [vmem:[#allocation5 + $0x130] sm:$0xff]
    %v126 = vld [vmem:[#allocation5 + $0x138] sm:$0xff]
    %v127 = vld [vmem:[#allocation5 + $0x140] sm:$0xff]
    %v128 = vld [vmem:[#allocation5 + $0x148] sm:$0xff]
    %v129 = vld [vmem:[#allocation5 + $0x150] sm:$0xff]
    %v130 = vld [vmem:[#allocation5 + $0x158] sm:$0xff]
    %v131 = vld [vmem:[#allocation5 + $0x160] sm:$0xff]
    %v132 = vld [vmem:[#allocation5 + $0x168] sm:$0xff]
    %v133 = vld [vmem:[#allocation5 + $0x170] sm:$0xff]
    %v134 = vld [vmem:[#allocation5 + $0x178] sm:$0xff]
    %v135 = vld [vmem:[#allocation5 + $0x180] sm:$0xff]
    %v136 = vld [vmem:[#allocation5 + $0x188] sm:$0xff]
    %v137 = vld [vmem:[#allocation5 + $0x190] sm:$0xff]
    %v138 = vld [vmem:[#allocation5 + $0x198] sm:$0xff]
    %v139 = vld [vmem:[#allocation5 + $0x1a0] sm:$0xff]
    %v140 = vld [vmem:[#allocation5 + $0x1a8] sm:$0xff]
    %v141 = vld [vmem:[#allocation5 + $0x1b0] sm:$0xff]
    %v142 = vld [vmem:[#allocation5 + $0x1b8] sm:$0xff]
    %v143 = vld [vmem:[#allocation5 + $0x1c0] sm:$0xff]
    %v144 = vld [vmem:[#allocation5 + $0x1c8] sm:$0xff]
    %v145 = vld [vmem:[#allocation5 + $0x1d0] sm:$0xff]
    %v146 = vld [vmem:[#allocation5 + $0x1d8] sm:$0xff]
    %v147 = vld [vmem:[#allocation5 + $0x1e0] sm:$0xff]
    %v148 = vld [vmem:[#allocation5 + $0x1e8] sm:$0xff]
    %v149 = vld [vmem:[#allocation5 + $0x1f0] sm:$0xff]
    %v150 = vld [vmem:[#allocation5 + $0x1f8] sm:$0xff]
    %v151 = vld [vmem:[#allocation5 + $0x200] sm:$0xff]
    %v152 = vld [vmem:[#allocation5 + $0x208] sm:$0xff]
    %v153 = vld [vmem:[#allocation5 + $0x210] sm:$0xff]
    %v154 = vld [vmem:[#allocation5 + $0x218] sm:$0xff]
    %v155 = vld [vmem:[#allocation5 + $0x220] sm:$0xff]
    %v156 = vld [vmem:[#allocation5 + $0x228] sm:$0xff]
    %v157 = vld [vmem:[#allocation5 + $0x230] sm:$0xff]
    %v158 = vld [vmem:[#allocation5 + $0x238] sm:$0xff]
    %v159 = vld [vmem:[#allocation5 + $0x240] sm:$0xff]
    %v160 = vld [vmem:[#allocation5 + $0x248] sm:$0xff]
    %v161 = vld [vmem:[#allocation5 + $0x250] sm:$0xff]
    %v162 = vld [vmem:[#allocation5 + $0x258] sm:$0xff]
    %v163 = vld [vmem:[#allocation5 + $0x260] sm:$0xff]
    %v164 = vld [vmem:[#allocation5 + $0x268] sm:$0xff]
    %v165 = vld [vmem:[#allocation5 + $0x270] sm:$0xff]
    %v166 = vld [vmem:[#allocation5 + $0x278] sm:$0xff]
    %v167 = vld [vmem:[#allocation5 + $0x280] sm:$0xff]
    %v168 = vld [vmem:[#allocation5 + $0x288] sm:$0xff]
    %v169 = vld [vmem:[#allocation5 + $0x290] sm:$0xff]
    %v170 = vld [vmem:[#allocation5 + $0x298] sm:$0xff]
    %v171 = vld [vmem:[#allocation5 + $0x2a0] sm:$0xff]
    %v172 = vld [vmem:[#allocation5 + $0x2a8] sm:$0xff]
    %v173 = vld [vmem:[#allocation5 + $0x2b0] sm:$0xff]
    %v174 = vld [vmem:[#allocation5 + $0x2b8] sm:$0xff]
    %v175 = vld [vmem:[#allocation5 + $0x2c0] sm:$0xff]
    %v176 = vld [vmem:[#allocation5 + $0x2c8] sm:$0xff]
    %v177 = vld [vmem:[#allocation5 + $0x2d0] sm:$0xff]
    %v178 = vld [vmem:[#allocation5 + $0x2d8] sm:$0xff]
    %v179 = vld [vmem:[#allocation5 + $0x2e0] sm:$0xff]
    %v180 = vld [vmem:[#allocation5 + $0x2e8] sm:$0xff]
    %v181 = vld [vmem:[#allocation5 + $0x2f0] sm:$0xff]
    %v182 = vld [vmem:[#allocation5 + $0x2f8] sm:$0xff]
    %v183 = vld [vmem:[#allocation5 + $0x300] sm:$0xff]
    %v184 = vld [vmem:[#allocation5 + $0x308] sm:$0xff]
    %v185 = vld [vmem:[#allocation5 + $0x310] sm:$0xff]
    %v186 = vld [vmem:[#allocation5 + $0x318] sm:$0xff]
    %v187 = vld [vmem:[#allocation5 + $0x320] sm:$0xff]
    %v188 = vld [vmem:[#allocation5 + $0x328] sm:$0xff]
    %v189 = vld [vmem:[#allocation5 + $0x330] sm:$0xff]
    %v190 = vld [vmem:[#allocation5 + $0x338] sm:$0xff]
    %v191 = vld [vmem:[#allocation5 + $0x340] sm:$0xff]
    %v192 = vld [vmem:[#allocation5 + $0x348] sm:$0xff]
    %v193 = vld [vmem:[#allocation5 + $0x350] sm:$0xff]
    %v194 = vld [vmem:[#allocation5 + $0x358] sm:$0xff]
    %v195 = vld [vmem:[#allocation5 + $0x360] sm:$0xff]
    %v196 = vld [vmem:[#allocation5 + $0x368] sm:$0xff]
    %v197 = vld [vmem:[#allocation5 + $0x370] sm:$0xff]
    %v198 = vld [vmem:[#allocation5 + $0x378] sm:$0xff]
    %v199 = vld [vmem:[#allocation5 + $0x380] sm:$0xff]
    %v200 = vld [vmem:[#allocation5 + $0x388] sm:$0xff]
    %v201 = vld [vmem:[#allocation5 + $0x390] sm:$0xff]
    %v202 = vld [vmem:[#allocation5 + $0x398] sm:$0xff]
    %v203 = vld [vmem:[#allocation5 + $0x3a0] sm:$0xff]
    %v204 = vld [vmem:[#allocation5 + $0x3a8] sm:$0xff]
    %v205 = vld [vmem:[#allocation5 + $0x3b0] sm:$0xff]
    %v206 = vld [vmem:[#allocation5 + $0x3b8] sm:$0xff]
    %v207 = vld [vmem:[#allocation5 + $0x3c0] sm:$0xff]
    %v208 = vld [vmem:[#allocation5 + $0x3c8] sm:$0xff]
    %v209 = vld [vmem:[#allocation5 + $0x3d0] sm:$0xff]
    %v210 = vld [vmem:[#allocation5 + $0x3d8] sm:$0xff]
    %v211 = vld [vmem:[#allocation5 + $0x3e0] sm:$0xff]
    %v212 = vld [vmem:[#allocation5 + $0x3e8] sm:$0xff]
    %v213 = vld [vmem:[#allocation5 + $0x3f0] sm:$0xff]
    %v214 = vld [vmem:[#allocation5 + $0x3f8] sm:$0xff]
    %v215 = vld [vmem:[#allocation5 + $0x400] sm:$0xff]
    %v216 = vld [vmem:[#allocation5 + $0x408] sm:$0xff]
    %v217 = vld [vmem:[#allocation5 + $0x410] sm:$0xff]
    %v218 = vld [vmem:[#allocation5 + $0x418] sm:$0xff]
    %v219 = vld [vmem:[#allocation5 + $0x420] sm:$0xff]
    %v220 = vld [vmem:[#allocation5 + $0x428] sm:$0xff]
    %v221 = vld [vmem:[#allocation5 + $0x430] sm:$0xff]
    %v222 = vld [vmem:[#allocation5 + $0x438] sm:$0xff]
    %v223 = vld [vmem:[#allocation5 + $0x440] sm:$0xff]
    %v224 = vld [vmem:[#allocation5 + $0x448] sm:$0xff]
    %v225 = vld [vmem:[#allocation5 + $0x450] sm:$0xff]
    %v226 = vld [vmem:[#allocation5 + $0x458] sm:$0xff]
    %v227 = vld [vmem:[#allocation5 + $0x460] sm:$0xff]
    %v228 = vld [vmem:[#allocation5 + $0x468] sm:$0xff]
    %v229 = vld [vmem:[#allocation5 + $0x470] sm:$0xff]
    %v230 = vld [vmem:[#allocation5 + $0x478] sm:$0xff]
    %v231 = vld [vmem:[#allocation5 + $0x480] sm:$0xff]
    %v232 = vld [vmem:[#allocation5 + $0x488] sm:$0xff]
    %v233 = vld [vmem:[#allocation5 + $0x490] sm:$0xff]
    %v234 = vld [vmem:[#allocation5 + $0x498] sm:$0xff]
    %v235 = vld [vmem:[#allocation5 + $0x4a0] sm:$0xff]
    %v236 = vld [vmem:[#allocation5 + $0x4a8] sm:$0xff]
    %v237 = vld [vmem:[#allocation5 + $0x4b0] sm:$0xff]
    %v238 = vld [vmem:[#allocation5 + $0x4b8] sm:$0xff]
    %v239 = vld [vmem:[#allocation5 + $0x4c0] sm:$0xff]
    %v240 = vld [vmem:[#allocation5 + $0x4c8] sm:$0xff]
    %v241 = vld [vmem:[#allocation5 + $0x4d0] sm:$0xff]
    %v242 = vld [vmem:[#allocation5 + $0x4d8] sm:$0xff]
    %v243 = vld [vmem:[#allocation5 + $0x4e0] sm:$0xff]
    %v244 = vld [vmem:[#allocation5 + $0x4e8] sm:$0xff]
    %v245 = vld [vmem:[#allocation5 + $0x4f0] sm:$0xff]
    %v246 = vld [vmem:[#allocation5 + $0x4f8] sm:$0xff]
    %v247 = vld [vmem:[%s2] sm:$0x3]
    %v249 = vlaneseq
    %v250 = vshrl.u32 %v249, 7
    %v251 = vsub.s32 0, %v250
    %v252 = vrot.slane %v247, %v251
    %v253 = vlaneseq
    %v254 = vshrl.u32 %v253, 7
    %v255 = vsub.s32 1, %v254
    %v256 = vrot.slane %v247, %v255
    %v419 = vunpack.c.l.b16 %v87
    %v420 = vunpack.c.h.b16 %v87
    %v421 = vunpack.c.l.b16 %v88
    %v422 = vunpack.c.h.b16 %v88
    %v423 = vunpack.c.l.b16 %v89
    %v424 = vunpack.c.h.b16 %v89
    %v425 = vunpack.c.l.b16 %v90
    %v426 = vunpack.c.h.b16 %v90
    %v427 = vunpack.c.l.b16 %v91
    %v428 = vunpack.c.h.b16 %v91
    %v429 = vunpack.c.l.b16 %v92
    %v430 = vunpack.c.h.b16 %v92
    %v431 = vunpack.c.l.b16 %v93
    %v432 = vunpack.c.h.b16 %v93
    %v433 = vunpack.c.l.b16 %v94
    %v434 = vunpack.c.h.b16 %v94
    %v435 = vunpack.c.l.b16 %v95
    %v436 = vunpack.c.h.b16 %v95
    %v437 = vunpack.c.l.b16 %v96
    %v438 = vunpack.c.h.b16 %v96
    %v439 = vunpack.c.l.b16 %v97
    %v440 = vunpack.c.h.b16 %v97
    %v441 = vunpack.c.l.b16 %v98
    %v442 = vunpack.c.h.b16 %v98
    %v443 = vunpack.c.l.b16 %v99
    %v444 = vunpack.c.h.b16 %v99
    %v445 = vunpack.c.l.b16 %v100
    %v446 = vunpack.c.h.b16 %v100
    %v447 = vunpack.c.l.b16 %v101
    %v448 = vunpack.c.h.b16 %v101
    %v449 = vunpack.c.l.b16 %v102
    %v450 = vunpack.c.h.b16 %v102
    %v451 = vunpack.c.l.b16 %v103
    %v452 = vunpack.c.h.b16 %v103
    %v453 = vunpack.c.l.b16 %v104
    %v454 = vunpack.c.h.b16 %v104
    %v455 = vunpack.c.l.b16 %v105
    %v456 = vunpack.c.h.b16 %v105
    %v457 = vunpack.c.l.b16 %v106
    %v458 = vunpack.c.h.b16 %v106
    %v459 = vunpack.c.l.b16 %v107
    %v460 = vunpack.c.h.b16 %v107
    %v461 = vunpack.c.l.b16 %v108
    %v462 = vunpack.c.h.b16 %v108
    %v463 = vunpack.c.l.b16 %v109
    %v464 = vunpack.c.h.b16 %v109
    %v465 = vunpack.c.l.b16 %v110
    %v466 = vunpack.c.h.b16 %v110
    %v467 = vunpack.c.l.b16 %v111
    %v468 = vunpack.c.h.b16 %v111
    %v469 = vunpack.c.l.b16 %v112
    %v470 = vunpack.c.h.b16 %v112
    %v471 = vunpack.c.l.b16 %v113
    %v472 = vunpack.c.h.b16 %v113
    %v473 = vunpack.c.l.b16 %v114
    %v474 = vunpack.c.h.b16 %v114
    %v475 = vunpack.c.l.b16 %v115
    %v476 = vunpack.c.h.b16 %v115
    %v477 = vunpack.c.l.b16 %v116
    %v478 = vunpack.c.h.b16 %v116
    %v479 = vunpack.c.l.b16 %v117
    %v480 = vunpack.c.h.b16 %v117
    %v481 = vunpack.c.l.b16 %v118
    %v482 = vunpack.c.h.b16 %v118
    %v483 = vunpack.c.l.b16 %v119
    %v484 = vunpack.c.h.b16 %v119
    %v485 = vunpack.c.l.b16 %v120
    %v486 = vunpack.c.h.b16 %v120
    %v487 = vunpack.c.l.b16 %v121
    %v488 = vunpack.c.h.b16 %v121
    %v489 = vunpack.c.l.b16 %v122
    %v490 = vunpack.c.h.b16 %v122
    %v491 = vunpack.c.l.b16 %v123
    %v492 = vunpack.c.h.b16 %v123
    %v493 = vunpack.c.l.b16 %v124
    %v494 = vunpack.c.h.b16 %v124
    %v495 = vunpack.c.l.b16 %v125
    %v496 = vunpack.c.h.b16 %v125
    %v497 = vunpack.c.l.b16 %v126
    %v498 = vunpack.c.h.b16 %v126
    %v499 = vunpack.c.l.b16 %v127
    %v500 = vunpack.c.h.b16 %v127
    %v501 = vunpack.c.l.b16 %v128
    %v502 = vunpack.c.h.b16 %v128
    %v503 = vunpack.c.l.b16 %v129
    %v504 = vunpack.c.h.b16 %v129
    %v505 = vunpack.c.l.b16 %v130
    %v506 = vunpack.c.h.b16 %v130
    %v507 = vunpack.c.l.b16 %v131
    %v508 = vunpack.c.h.b16 %v131
    %v509 = vunpack.c.l.b16 %v132
    %v510 = vunpack.c.h.b16 %v132
    %v511 = vunpack.c.l.b16 %v133
    %v512 = vunpack.c.h.b16 %v133
    %v513 = vunpack.c.l.b16 %v134
    %v514 = vunpack.c.h.b16 %v134
    %v515 = vunpack.c.l.b16 %v135
    %v516 = vunpack.c.h.b16 %v135
    %v517 = vunpack.c.l.b16 %v136
    %v518 = vunpack.c.h.b16 %v136
    %v519 = vunpack.c.l.b16 %v137
    %v520 = vunpack.c.h.b16 %v137
    %v521 = vunpack.c.l.b16 %v138
    %v522 = vunpack.c.h.b16 %v138
    %v523 = vunpack.c.l.b16 %v139
    %v524 = vunpack.c.h.b16 %v139
    %v525 = vunpack.c.l.b16 %v140
    %v526 = vunpack.c.h.b16 %v140
    %v527 = vunpack.c.l.b16 %v141
    %v528 = vunpack.c.h.b16 %v141
    %v529 = vunpack.c.l.b16 %v142
    %v530 = vunpack.c.h.b16 %v142
    %v531 = vunpack.c.l.b16 %v143
    %v532 = vunpack.c.h.b16 %v143
    %v533 = vunpack.c.l.b16 %v144
    %v534 = vunpack.c.h.b16 %v144
    %v535 = vunpack.c.l.b16 %v145
    %v536 = vunpack.c.h.b16 %v145
    %v537 = vunpack.c.l.b16 %v146
    %v538 = vunpack.c.h.b16 %v146
    %v539 = vunpack.c.l.b16 %v147
    %v540 = vunpack.c.h.b16 %v147
    %v541 = vunpack.c.l.b16 %v148
    %v542 = vunpack.c.h.b16 %v148
    %v543 = vunpack.c.l.b16 %v149
    %v544 = vunpack.c.h.b16 %v149
    %v545 = vunpack.c.l.b16 %v150
    %v546 = vunpack.c.h.b16 %v150
    %v547 = vunpack.c.l.b16 %v151
    %v548 = vunpack.c.h.b16 %v151
    %v549 = vunpack.c.l.b16 %v152
    %v550 = vunpack.c.h.b16 %v152
    %v551 = vunpack.c.l.b16 %v153
    %v552 = vunpack.c.h.b16 %v153
    %v553 = vunpack.c.l.b16 %v154
    %v554 = vunpack.c.h.b16 %v154
    %v555 = vunpack.c.l.b16 %v155
    %v556 = vunpack.c.h.b16 %v155
    %v557 = vunpack.c.l.b16 %v156
    %v558 = vunpack.c.h.b16 %v156
    %v559 = vunpack.c.l.b16 %v157
    %v560 = vunpack.c.h.b16 %v157
    %v561 = vunpack.c.l.b16 %v158
    %v562 = vunpack.c.h.b16 %v158
    %v563 = vunpack.c.l.b16 %v159
    %v564 = vunpack.c.h.b16 %v159
    %v565 = vunpack.c.l.b16 %v160
    %v566 = vunpack.c.h.b16 %v160
    %v567 = vunpack.c.l.b16 %v161
    %v568 = vunpack.c.h.b16 %v161
    %v569 = vunpack.c.l.b16 %v162
    %v570 = vunpack.c.h.b16 %v162
    %v571 = vunpack.c.l.b16 %v163
    %v572 = vunpack.c.h.b16 %v163
    %v573 = vunpack.c.l.b16 %v164
    %v574 = vunpack.c.h.b16 %v164
    %v575 = vunpack.c.l.b16 %v165
    %v576 = vunpack.c.h.b16 %v165
    %v577 = vunpack.c.l.b16 %v166
    %v578 = vunpack.c.h.b16 %v166
    %v579 = vunpack.c.l.b16 %v167
    %v580 = vunpack.c.h.b16 %v167
    %v581 = vunpack.c.l.b16 %v168
    %v582 = vunpack.c.h.b16 %v168
    %v583 = vunpack.c.l.b16 %v169
    %v584 = vunpack.c.h.b16 %v169
    %v585 = vunpack.c.l.b16 %v170
    %v586 = vunpack.c.h.b16 %v170
    %v587 = vunpack.c.l.b16 %v171
    %v588 = vunpack.c.h.b16 %v171
    %v589 = vunpack.c.l.b16 %v172
    %v590 = vunpack.c.h.b16 %v172
    %v591 = vunpack.c.l.b16 %v173
    %v592 = vunpack.c.h.b16 %v173
    %v593 = vunpack.c.l.b16 %v174
    %v594 = vunpack.c.h.b16 %v174
    %v595 = vunpack.c.l.b16 %v175
    %v596 = vunpack.c.h.b16 %v175
    %v597 = vunpack.c.l.b16 %v176
    %v598 = vunpack.c.h.b16 %v176
    %v599 = vunpack.c.l.b16 %v177
    %v600 = vunpack.c.h.b16 %v177
    %v601 = vunpack.c.l.b16 %v178
    %v602 = vunpack.c.h.b16 %v178
    %v603 = vunpack.c.l.b16 %v179
    %v604 = vunpack.c.h.b16 %v179
    %v605 = vunpack.c.l.b16 %v180
    %v606 = vunpack.c.h.b16 %v180
    %v607 = vunpack.c.l.b16 %v181
    %v608 = vunpack.c.h.b16 %v181
    %v609 = vunpack.c.l.b16 %v182
    %v610 = vunpack.c.h.b16 %v182
    %v611 = vunpack.c.l.b16 %v183
    %v612 = vunpack.c.h.b16 %v183
    %v613 = vunpack.c.l.b16 %v184
    %v614 = vunpack.c.h.b16 %v184
    %v615 = vunpack.c.l.b16 %v185
    %v616 = vunpack.c.h.b16 %v185
    %v617 = vunpack.c.l.b16 %v186
    %v618 = vunpack.c.h.b16 %v186
    %v619 = vunpack.c.l.b16 %v187
    %v620 = vunpack.c.h.b16 %v187
    %v621 = vunpack.c.l.b16 %v188
    %v622 = vunpack.c.h.b16 %v188
    %v623 = vunpack.c.l.b16 %v189
    %v624 = vunpack.c.h.b16 %v189
    %v625 = vunpack.c.l.b16 %v190
    %v626 = vunpack.c.h.b16 %v190
    %v627 = vunpack.c.l.b16 %v191
    %v628 = vunpack.c.h.b16 %v191
    %v629 = vunpack.c.l.b16 %v192
    %v630 = vunpack.c.h.b16 %v192
    %v631 = vunpack.c.l.b16 %v193
    %v632 = vunpack.c.h.b16 %v193
    %v633 = vunpack.c.l.b16 %v194
    %v634 = vunpack.c.h.b16 %v194
    %v635 = vunpack.c.l.b16 %v195
    %v636 = vunpack.c.h.b16 %v195
    %v637 = vunpack.c.l.b16 %v196
    %v638 = vunpack.c.h.b16 %v196
    %v639 = vunpack.c.l.b16 %v197
    %v640 = vunpack.c.h.b16 %v197
    %v641 = vunpack.c.l.b16 %v198
    %v642 = vunpack.c.h.b16 %v198
    %v643 = vunpack.c.l.b16 %v199
    %v644 = vunpack.c.h.b16 %v199
    %v645 = vunpack.c.l.b16 %v200
    %v646 = vunpack.c.h.b16 %v200
    %v647 = vunpack.c.l.b16 %v201
    %v648 = vunpack.c.h.b16 %v201
    %v649 = vunpack.c.l.b16 %v202
    %v650 = vunpack.c.h.b16 %v202
    %v651 = vunpack.c.l.b16 %v203
    %v652 = vunpack.c.h.b16 %v203
    %v653 = vunpack.c.l.b16 %v204
    %v654 = vunpack.c.h.b16 %v204
    %v655 = vunpack.c.l.b16 %v205
    %v656 = vunpack.c.h.b16 %v205
    %v657 = vunpack.c.l.b16 %v206
    %v658 = vunpack.c.h.b16 %v206
    %v659 = vunpack.c.l.b16 %v207
    %v660 = vunpack.c.h.b16 %v207
    %v661 = vunpack.c.l.b16 %v208
    %v662 = vunpack.c.h.b16 %v208
    %v663 = vunpack.c.l.b16 %v209
    %v664 = vunpack.c.h.b16 %v209
    %v665 = vunpack.c.l.b16 %v210
    %v666 = vunpack.c.h.b16 %v210
    %v667 = vunpack.c.l.b16 %v211
    %v668 = vunpack.c.h.b16 %v211
    %v669 = vunpack.c.l.b16 %v212
    %v670 = vunpack.c.h.b16 %v212
    %v671 = vunpack.c.l.b16 %v213
    %v672 = vunpack.c.h.b16 %v213
    %v673 = vunpack.c.l.b16 %v214
    %v674 = vunpack.c.h.b16 %v214
    %v675 = vunpack.c.l.b16 %v215
    %v676 = vunpack.c.h.b16 %v215
    %v677 = vunpack.c.l.b16 %v216
    %v678 = vunpack.c.h.b16 %v216
    %v679 = vunpack.c.l.b16 %v217
    %v680 = vunpack.c.h.b16 %v217
    %v681 = vunpack.c.l.b16 %v218
    %v682 = vunpack.c.h.b16 %v218
    %v683 = vunpack.c.l.b16 %v219
    %v684 = vunpack.c.h.b16 %v219
    %v685 = vunpack.c.l.b16 %v220
    %v686 = vunpack.c.h.b16 %v220
    %v687 = vunpack.c.l.b16 %v221
    %v688 = vunpack.c.h.b16 %v221
    %v689 = vunpack.c.l.b16 %v222
    %v690 = vunpack.c.h.b16 %v222
    %v691 = vunpack.c.l.b16 %v223
    %v692 = vunpack.c.h.b16 %v223
    %v693 = vunpack.c.l.b16 %v224
    %v694 = vunpack.c.h.b16 %v224
    %v695 = vunpack.c.l.b16 %v225
    %v696 = vunpack.c.h.b16 %v225
    %v697 = vunpack.c.l.b16 %v226
    %v698 = vunpack.c.h.b16 %v226
    %v699 = vunpack.c.l.b16 %v227
    %v700 = vunpack.c.h.b16 %v227
    %v701 = vunpack.c.l.b16 %v228
    %v702 = vunpack.c.h.b16 %v228
    %v703 = vunpack.c.l.b16 %v229
    %v704 = vunpack.c.h.b16 %v229
    %v705 = vunpack.c.l.b16 %v230
    %v706 = vunpack.c.h.b16 %v230
    %v707 = vunpack.c.l.b16 %v231
    %v708 = vunpack.c.h.b16 %v231
    %v709 = vunpack.c.l.b16 %v232
    %v710 = vunpack.c.h.b16 %v232
    %v711 = vunpack.c.l.b16 %v233
    %v712 = vunpack.c.h.b16 %v233
    %v713 = vunpack.c.l.b16 %v234
    %v714 = vunpack.c.h.b16 %v234
    %v715 = vunpack.c.l.b16 %v235
    %v716 = vunpack.c.h.b16 %v235
    %v717 = vunpack.c.l.b16 %v236
    %v718 = vunpack.c.h.b16 %v236
    %v719 = vunpack.c.l.b16 %v237
    %v720 = vunpack.c.h.b16 %v237
    %v721 = vunpack.c.l.b16 %v238
    %v722 = vunpack.c.h.b16 %v238
    %v723 = vunpack.c.l.b16 %v239
    %v724 = vunpack.c.h.b16 %v239
    %v725 = vunpack.c.l.b16 %v240
    %v726 = vunpack.c.h.b16 %v240
    %v727 = vunpack.c.l.b16 %v241
    %v728 = vunpack.c.h.b16 %v241
    %v729 = vunpack.c.l.b16 %v242
    %v730 = vunpack.c.h.b16 %v242
    %v731 = vunpack.c.l.b16 %v243
    %v732 = vunpack.c.h.b16 %v243
    %v733 = vunpack.c.l.b16 %v244
    %v734 = vunpack.c.h.b16 %v244
    %v735 = vunpack.c.l.b16 %v245
    %v736 = vunpack.c.h.b16 %v245
    %v737 = vunpack.c.l.b16 %v246
    %v738 = vunpack.c.h.b16 %v246
    %v739 = vpack.c.b16 %v421, %v419
    %v740 = vpack.c.b16 %v422, %v420
    %v741 = vpack.c.b16 %v425, %v423
    %v742 = vpack.c.b16 %v426, %v424
    %v743 = vpack.c.b16 %v429, %v427
    %v744 = vpack.c.b16 %v430, %v428
    %v745 = vpack.c.b16 %v433, %v431
    %v746 = vpack.c.b16 %v434, %v432
    %v747 = vpack.c.b16 %v437, %v435
    %v748 = vpack.c.b16 %v438, %v436
    %v749 = vpack.c.b16 %v441, %v439
    %v750 = vpack.c.b16 %v442, %v440
    %v751 = vpack.c.b16 %v445, %v443
    %v752 = vpack.c.b16 %v446, %v444
    %v753 = vpack.c.b16 %v449, %v447
    %v754 = vpack.c.b16 %v450, %v448
    %v755 = vpack.c.b16 %v453, %v451
    %v756 = vpack.c.b16 %v454, %v452
    %v757 = vpack.c.b16 %v457, %v455
    %v758 = vpack.c.b16 %v458, %v456
    %v759 = vpack.c.b16 %v461, %v459
    %v760 = vpack.c.b16 %v462, %v460
    %v761 = vpack.c.b16 %v465, %v463
    %v762 = vpack.c.b16 %v466, %v464
    %v763 = vpack.c.b16 %v469, %v467
    %v764 = vpack.c.b16 %v470, %v468
    %v765 = vpack.c.b16 %v473, %v471
    %v766 = vpack.c.b16 %v474, %v472
    %v767 = vpack.c.b16 %v477, %v475
    %v768 = vpack.c.b16 %v478, %v476
    %v769 = vpack.c.b16 %v481, %v479
    %v770 = vpack.c.b16 %v482, %v480
    %v771 = vpack.c.b16 %v485, %v483
    %v772 = vpack.c.b16 %v486, %v484
    %v773 = vpack.c.b16 %v489, %v487
    %v774 = vpack.c.b16 %v490, %v488
    %v775 = vpack.c.b16 %v493, %v491
    %v776 = vpack.c.b16 %v494, %v492
    %v777 = vpack.c.b16 %v497, %v495
    %v778 = vpack.c.b16 %v498, %v496
    %v779 = vpack.c.b16 %v501, %v499
    %v780 = vpack.c.b16 %v502, %v500
    %v781 = vpack.c.b16 %v505, %v503
    %v782 = vpack.c.b16 %v506, %v504
    %v783 = vpack.c.b16 %v509, %v507
    %v784 = vpack.c.b16 %v510, %v508
    %v785 = vpack.c.b16 %v513, %v511
    %v786 = vpack.c.b16 %v514, %v512
    %v787 = vpack.c.b16 %v517, %v515
    %v788 = vpack.c.b16 %v518, %v516
    %v789 = vpack.c.b16 %v521, %v519
    %v790 = vpack.c.b16 %v522, %v520
    %v791 = vpack.c.b16 %v525, %v523
    %v792 = vpack.c.b16 %v526, %v524
    %v793 = vpack.c.b16 %v529, %v527
    %v794 = vpack.c.b16 %v530, %v528
    %v795 = vpack.c.b16 %v533, %v531
    %v796 = vpack.c.b16 %v534, %v532
    %v797 = vpack.c.b16 %v537, %v535
    %v798 = vpack.c.b16 %v538, %v536
    %v799 = vpack.c.b16 %v541, %v539
    %v800 = vpack.c.b16 %v542, %v540
    %v801 = vpack.c.b16 %v545, %v543
    %v802 = vpack.c.b16 %v546, %v544
    %v803 = vpack.c.b16 %v549, %v547
    %v804 = vpack.c.b16 %v550, %v548
    %v805 = vpack.c.b16 %v553, %v551
    %v806 = vpack.c.b16 %v554, %v552
    %v807 = vpack.c.b16 %v557, %v555
    %v808 = vpack.c.b16 %v558, %v556
    %v809 = vpack.c.b16 %v561, %v559
    %v810 = vpack.c.b16 %v562, %v560
    %v811 = vpack.c.b16 %v565, %v563
    %v812 = vpack.c.b16 %v566, %v564
    %v813 = vpack.c.b16 %v569, %v567
    %v814 = vpack.c.b16 %v570, %v568
    %v815 = vpack.c.b16 %v573, %v571
    %v816 = vpack.c.b16 %v574, %v572
    %v817 = vpack.c.b16 %v577, %v575
    %v818 = vpack.c.b16 %v578, %v576
    %v819 = vpack.c.b16 %v581, %v579
    %v820 = vpack.c.b16 %v582, %v580
    %v821 = vpack.c.b16 %v585, %v583
    %v822 = vpack.c.b16 %v586, %v584
    %v823 = vpack.c.b16 %v589, %v587
    %v824 = vpack.c.b16 %v590, %v588
    %v825 = vpack.c.b16 %v593, %v591
    %v826 = vpack.c.b16 %v594, %v592
    %v827 = vpack.c.b16 %v597, %v595
    %v828 = vpack.c.b16 %v598, %v596
    %v829 = vpack.c.b16 %v601, %v599
    %v830 = vpack.c.b16 %v602, %v600
    %v831 = vpack.c.b16 %v605, %v603
    %v832 = vpack.c.b16 %v606, %v604
    %v833 = vpack.c.b16 %v609, %v607
    %v834 = vpack.c.b16 %v610, %v608
    %v835 = vpack.c.b16 %v613, %v611
    %v836 = vpack.c.b16 %v614, %v612
    %v837 = vpack.c.b16 %v617, %v615
    %v838 = vpack.c.b16 %v618, %v616
    %v839 = vpack.c.b16 %v621, %v619
    %v840 = vpack.c.b16 %v622, %v620
    %v841 = vpack.c.b16 %v625, %v623
    %v842 = vpack.c.b16 %v626, %v624
    %v843 = vpack.c.b16 %v629, %v627
    %v844 = vpack.c.b16 %v630, %v628
    %v845 = vpack.c.b16 %v633, %v631
    %v846 = vpack.c.b16 %v634, %v632
    %v847 = vpack.c.b16 %v637, %v635
    %v848 = vpack.c.b16 %v638, %v636
    %v849 = vpack.c.b16 %v641, %v639
    %v850 = vpack.c.b16 %v642, %v640
    %v851 = vpack.c.b16 %v645, %v643
    %v852 = vpack.c.b16 %v646, %v644
    %v853 = vpack.c.b16 %v649, %v647
    %v854 = vpack.c.b16 %v650, %v648
    %v855 = vpack.c.b16 %v653, %v651
    %v856 = vpack.c.b16 %v654, %v652
    %v857 = vpack.c.b16 %v657, %v655
    %v858 = vpack.c.b16 %v658, %v656
    %v859 = vpack.c.b16 %v661, %v659
    %v860 = vpack.c.b16 %v662, %v660
    %v861 = vpack.c.b16 %v665, %v663
    %v862 = vpack.c.b16 %v666, %v664
    %v863 = vpack.c.b16 %v669, %v667
    %v864 = vpack.c.b16 %v670, %v668
    %v865 = vpack.c.b16 %v673, %v671
    %v866 = vpack.c.b16 %v674, %v672
    %v867 = vpack.c.b16 %v677, %v675
    %v868 = vpack.c.b16 %v678, %v676
    %v869 = vpack.c.b16 %v681, %v679
    %v870 = vpack.c.b16 %v682, %v680
    %v871 = vpack.c.b16 %v685, %v683
    %v872 = vpack.c.b16 %v686, %v684
    %v873 = vpack.c.b16 %v689, %v687
    %v874 = vpack.c.b16 %v690, %v688
    %v875 = vpack.c.b16 %v693, %v691
    %v876 = vpack.c.b16 %v694, %v692
    %v877 = vpack.c.b16 %v697, %v695
    %v878 = vpack.c.b16 %v698, %v696
    %v879 = vpack.c.b16 %v701, %v699
    %v880 = vpack.c.b16 %v702, %v700
    %v881 = vpack.c.b16 %v705, %v703
    %v882 = vpack.c.b16 %v706, %v704
    %v883 = vpack.c.b16 %v709, %v707
    %v884 = vpack.c.b16 %v710, %v708
    %v885 = vpack.c.b16 %v713, %v711
    %v886 = vpack.c.b16 %v714, %v712
    %v887 = vpack.c.b16 %v717, %v715
    %v888 = vpack.c.b16 %v718, %v716
    %v889 = vpack.c.b16 %v721, %v719
    %v890 = vpack.c.b16 %v722, %v720
    %v891 = vpack.c.b16 %v725, %v723
    %v892 = vpack.c.b16 %v726, %v724
    %v893 = vpack.c.b16 %v729, %v727
    %v894 = vpack.c.b16 %v730, %v728
    %v895 = vpack.c.b16 %v733, %v731
    %v896 = vpack.c.b16 %v734, %v732
    %v897 = vpack.c.b16 %v737, %v735
    %v898 = vpack.c.b16 %v738, %v736
    %1059 = vmatprep.subr.bf16.mxu0 %v740
    %1060 = vmatpush1.bf16.msra.mxu0 %v739
    %1061 = vmatprep.subr.bf16.mxu0 %v742
    %1062 = vmatpush1.bf16.msra.mxu0 %v741
    %1063 = vmatprep.subr.bf16.mxu0 %v744
    %1064 = vmatpush1.bf16.msra.mxu0 %v743
    %1065 = vmatprep.subr.bf16.mxu0 %v746
    %1066 = vmatpush1.bf16.msra.mxu0 %v745
    %1067 = vmatprep.subr.bf16.mxu0 %v748
    %1068 = vmatpush1.bf16.msra.mxu0 %v747
    %1069 = vmatprep.subr.bf16.mxu0 %v750
    %1070 = vmatpush1.bf16.msra.mxu0 %v749
    %1071 = vmatprep.subr.bf16.mxu0 %v752
    %1072 = vmatpush1.bf16.msra.mxu0 %v751
    %1073 = vmatprep.subr.bf16.mxu0 %v754
    %1074 = vmatpush1.bf16.msra.mxu0 %v753
    %1075 = vmatprep.subr.bf16.mxu0 %v756
    %1076 = vmatpush1.bf16.msra.mxu0 %v755
    %1077 = vmatprep.subr.bf16.mxu0 %v758
    %1078 = vmatpush1.bf16.msra.mxu0 %v757
    %1079 = vmatprep.subr.bf16.mxu0 %v760
    %1080 = vmatpush1.bf16.msra.mxu0 %v759
    %1081 = vmatprep.subr.bf16.mxu0 %v762
    %1082 = vmatpush1.bf16.msra.mxu0 %v761
    %1083 = vmatprep.subr.bf16.mxu0 %v764
    %1084 = vmatpush1.bf16.msra.mxu0 %v763
    %1085 = vmatprep.subr.bf16.mxu0 %v766
    %1086 = vmatpush1.bf16.msra.mxu0 %v765
    %1087 = vmatprep.subr.bf16.mxu0 %v768
    %1088 = vmatpush1.bf16.msra.mxu0 %v767
    %1089 = vmatprep.subr.bf16.mxu0 %v770
    %1090 = vmatpush1.bf16.msra.mxu0 %v769
    %1091 = vmatprep.mubr.bf16.mxu0 %v78
    %1092 = vmatmul.mubr.bf16.gmra.mrb[0].mxu0 %v77
    %v1093 = vpop.f32.mrb[0].mxu0
    %v1094 = vadd.f32 %v252, %v1093
    %v1095 = vpop.f32.mrb[0].mxu0
    %v1096 = vadd.f32 %v256, %v1095
    %v1097 = vpop.f32.mrb[0].mxu0
    %v1098 = vpop.f32.mrb[0].mxu0
    %1099 = vdwg.mxu0
    %1100 = vmatprep.subr.bf16.mxu0 %v772
    %1101 = vmatpush1.bf16.msra.mxu0 %v771
    %1102 = vmatprep.subr.bf16.mxu0 %v774
    %1103 = vmatpush1.bf16.msra.mxu0 %v773
    %1104 = vmatprep.subr.bf16.mxu0 %v776
    %1105 = vmatpush1.bf16.msra.mxu0 %v775
    %1106 = vmatprep.subr.bf16.mxu0 %v778
    %1107 = vmatpush1.bf16.msra.mxu0 %v777
    %1108 = vmatprep.subr.bf16.mxu0 %v780
    %1109 = vmatpush1.bf16.msra.mxu0 %v779
    %1110 = vmatprep.subr.bf16.mxu0 %v782
    %1111 = vmatpush1.bf16.msra.mxu0 %v781
    %1112 = vmatprep.subr.bf16.mxu0 %v784
    %1113 = vmatpush1.bf16.msra.mxu0 %v783
    %1114 = vmatprep.subr.bf16.mxu0 %v786
    %1115 = vmatpush1.bf16.msra.mxu0 %v785
    %1116 = vmatprep.subr.bf16.mxu0 %v788
    %1117 = vmatpush1.bf16.msra.mxu0 %v787
    %1118 = vmatprep.subr.bf16.mxu0 %v790
    %1119 = vmatpush1.bf16.msra.mxu0 %v789
    %1120 = vmatprep.subr.bf16.mxu0 %v792
    %1121 = vmatpush1.bf16.msra.mxu0 %v791
    %1122 = vmatprep.subr.bf16.mxu0 %v794
    %1123 = vmatpush1.bf16.msra.mxu0 %v793
    %1124 = vmatprep.subr.bf16.mxu0 %v796
    %1125 = vmatpush1.bf16.msra.mxu0 %v795
    %1126 = vmatprep.subr.bf16.mxu0 %v798
    %1127 = vmatpush1.bf16.msra.mxu0 %v797
    %1128 = vmatprep.subr.bf16.mxu0 %v800
    %1129 = vmatpush1.bf16.msra.mxu0 %v799
    %1130 = vmatprep.subr.bf16.mxu0 %v802
    %1131 = vmatpush1.bf16.msra.mxu0 %v801
    %1132 = vmatprep.mubr.bf16.mxu0 %v80
    %1133 = vmatmul.mubr.bf16.gmra.mrb[0].mxu0 %v79
    %v1134 = vpop.f32.mrb[0].mxu0
    %v1135 = vadd.f32 %v1094, %v1134
    %v1136 = vpop.f32.mrb[0].mxu0
    %v1137 = vadd.f32 %v1096, %v1136
    %v1138 = vpop.f32.mrb[0].mxu0
    %v1139 = vpop.f32.mrb[0].mxu0
    %1140 = vdwg.mxu0
    %1141 = vmatprep.subr.bf16.mxu0 %v804
    %1142 = vmatpush1.bf16.msra.mxu0 %v803
    %1143 = vmatprep.subr.bf16.mxu0 %v806
    %1144 = vmatpush1.bf16.msra.mxu0 %v805
    %1145 = vmatprep.subr.bf16.mxu0 %v808
    %1146 = vmatpush1.bf16.msra.mxu0 %v807
    %1147 = vmatprep.subr.bf16.mxu0 %v810
    %1148 = vmatpush1.bf16.msra.mxu0 %v809
    %1149 = vmatprep.subr.bf16.mxu0 %v812
    %1150 = vmatpush1.bf16.msra.mxu0 %v811
    %1151 = vmatprep.subr.bf16.mxu0 %v814
    %1152 = vmatpush1.bf16.msra.mxu0 %v813
    %1153 = vmatprep.subr.bf16.mxu0 %v816
    %1154 = vmatpush1.bf16.msra.mxu0 %v815
    %1155 = vmatprep.subr.bf16.mxu0 %v818
    %1156 = vmatpush1.bf16.msra.mxu0 %v817
    %1157 = vmatprep.subr.bf16.mxu0 %v820
    %1158 = vmatpush1.bf16.msra.mxu0 %v819
    %1159 = vmatprep.subr.bf16.mxu0 %v822
    %1160 = vmatpush1.bf16.msra.mxu0 %v821
    %1161 = vmatprep.subr.bf16.mxu0 %v824
    %1162 = vmatpush1.bf16.msra.mxu0 %v823
    %1163 = vmatprep.subr.bf16.mxu0 %v826
    %1164 = vmatpush1.bf16.msra.mxu0 %v825
    %1165 = vmatprep.subr.bf16.mxu0 %v828
    %1166 = vmatpush1.bf16.msra.mxu0 %v827
    %1167 = vmatprep.subr.bf16.mxu0 %v830
    %1168 = vmatpush1.bf16.msra.mxu0 %v829
    %1169 = vmatprep.subr.bf16.mxu0 %v832
    %1170 = vmatpush1.bf16.msra.mxu0 %v831
    %1171 = vmatprep.subr.bf16.mxu0 %v834
    %1172 = vmatpush1.bf16.msra.mxu0 %v833
    %1173 = vmatprep.mubr.bf16.mxu0 %v82
    %1174 = vmatmul.mubr.bf16.gmra.mrb[0].mxu0 %v81
    %v1175 = vpop.f32.mrb[0].mxu0
    %v1176 = vadd.f32 %v1135, %v1175
    %v1177 = vpop.f32.mrb[0].mxu0
    %v1178 = vadd.f32 %v1137, %v1177
    %v1179 = vpop.f32.mrb[0].mxu0
    %v1180 = vpop.f32.mrb[0].mxu0
    %1181 = vdwg.mxu0
    %1182 = vmatprep.subr.bf16.mxu0 %v836
    %1183 = vmatpush1.bf16.msra.mxu0 %v835
    %1184 = vmatprep.subr.bf16.mxu0 %v838
    %1185 = vmatpush1.bf16.msra.mxu0 %v837
    %1186 = vmatprep.subr.bf16.mxu0 %v840
    %1187 = vmatpush1.bf16.msra.mxu0 %v839
    %1188 = vmatprep.subr.bf16.mxu0 %v842
    %1189 = vmatpush1.bf16.msra.mxu0 %v841
    %1190 = vmatprep.subr.bf16.mxu0 %v844
    %1191 = vmatpush1.bf16.msra.mxu0 %v843
    %1192 = vmatprep.subr.bf16.mxu0 %v846
    %1193 = vmatpush1.bf16.msra.mxu0 %v845
    %1194 = vmatprep.subr.bf16.mxu0 %v848
    %1195 = vmatpush1.bf16.msra.mxu0 %v847
    %1196 = vmatprep.subr.bf16.mxu0 %v850
    %1197 = vmatpush1.bf16.msra.mxu0 %v849
    %1198 = vmatprep.subr.bf16.mxu0 %v852
    %1199 = vmatpush1.bf16.msra.mxu0 %v851
    %1200 = vmatprep.subr.bf16.mxu0 %v854
    %1201 = vmatpush1.bf16.msra.mxu0 %v853
    %1202 = vmatprep.subr.bf16.mxu0 %v856
    %1203 = vmatpush1.bf16.msra.mxu0 %v855
    %1204 = vmatprep.subr.bf16.mxu0 %v858
    %1205 = vmatpush1.bf16.msra.mxu0 %v857
    %1206 = vmatprep.subr.bf16.mxu0 %v860
    %1207 = vmatpush1.bf16.msra.mxu0 %v859
    %1208 = vmatprep.subr.bf16.mxu0 %v862
    %1209 = vmatpush1.bf16.msra.mxu0 %v861
    %1210 = vmatprep.subr.bf16.mxu0 %v864
    %1211 = vmatpush1.bf16.msra.mxu0 %v863
    %1212 = vmatprep.subr.bf16.mxu0 %v866
    %1213 = vmatpush1.bf16.msra.mxu0 %v865
    %1214 = vmatprep.mubr.bf16.mxu0 %v84
    %1215 = vmatmul.mubr.bf16.gmra.mrb[0].mxu0 %v83
    %v1216 = vpop.f32.mrb[0].mxu0
    %v1217 = vadd.f32 %v1176, %v1216
    %v1218 = vpop.f32.mrb[0].mxu0
    %v1219 = vadd.f32 %v1178, %v1218
    %v1220 = vpop.f32.mrb[0].mxu0
    %v1221 = vpop.f32.mrb[0].mxu0
    %1222 = vdwg.mxu0
    %1223 = vmatprep.subr.bf16.mxu0 %v868
    %1224 = vmatpush1.bf16.msra.mxu0 %v867
    %1225 = vmatprep.subr.bf16.mxu0 %v870
    %1226 = vmatpush1.bf16.msra.mxu0 %v869
    %1227 = vmatprep.subr.bf16.mxu0 %v872
    %1228 = vmatpush1.bf16.msra.mxu0 %v871
    %1229 = vmatprep.subr.bf16.mxu0 %v874
    %1230 = vmatpush1.bf16.msra.mxu0 %v873
    %1231 = vmatprep.subr.bf16.mxu0 %v876
    %1232 = vmatpush1.bf16.msra.mxu0 %v875
    %1233 = vmatprep.subr.bf16.mxu0 %v878
    %1234 = vmatpush1.bf16.msra.mxu0 %v877
    %1235 = vmatprep.subr.bf16.mxu0 %v880
    %1236 = vmatpush1.bf16.msra.mxu0 %v879
    %1237 = vmatprep.subr.bf16.mxu0 %v882
    %1238 = vmatpush1.bf16.msra.mxu0 %v881
    %1239 = vmatprep.subr.bf16.mxu0 %v884
    %1240 = vmatpush1.bf16.msra.mxu0 %v883
    %1241 = vmatprep.subr.bf16.mxu0 %v886
    %1242 = vmatpush1.bf16.msra.mxu0 %v885
    %1243 = vmatprep.subr.bf16.mxu0 %v888
    %1244 = vmatpush1.bf16.msra.mxu0 %v887
    %1245 = vmatprep.subr.bf16.mxu0 %v890
    %1246 = vmatpush1.bf16.msra.mxu0 %v889
    %1247 = vmatprep.subr.bf16.mxu0 %v892
    %1248 = vmatpush1.bf16.msra.mxu0 %v891
    %1249 = vmatprep.subr.bf16.mxu0 %v894
    %1250 = vmatpush1.bf16.msra.mxu0 %v893
    %1251 = vmatprep.subr.bf16.mxu0 %v896
    %1252 = vmatpush1.bf16.msra.mxu0 %v895
    %1253 = vmatprep.subr.bf16.mxu0 %v898
    %1254 = vmatpush1.bf16.msra.mxu0 %v897
    %1255 = vmatprep.mubr.bf16.mxu0 %v86
    %1256 = vmatmul.mubr.bf16.gmra.mrb[0].mxu0 %v85
    %v1257 = vpop.f32.mrb[0].mxu0
    %v1258 = vadd.f32 %v1217, %v1257
    %v1259 = vpop.f32.mrb[0].mxu0
    %v1260 = vadd.f32 %v1219, %v1259
    %v1261 = vpop.f32.mrb[0].mxu0
    %v1262 = vpop.f32.mrb[0].mxu0
    %1263 = vdwg.mxu0
    %v1264 = vmax.f32 %v1258, 0.0
    %v1265 = vmax.f32 %v1260, 0.0
    %v1266 = vpack.c.bf16 %v1264, %v1264
    %v1267 = vpack.c.bf16 %v1265, %v1265
    %v1268 = vld [vmem:[#allocation7] sm:$0xf]
    %v1269 = vld [vmem:[#allocation7 + $0x4] sm:$0xf]
    %v1270 = vld [vmem:[#allocation7 + $0x8] sm:$0xf]
    %v1271 = vld [vmem:[#allocation7 + $0xc] sm:$0xf]
    %v1272 = vld [vmem:[#allocation7 + $0x10] sm:$0xf]
    %v1273 = vld [vmem:[#allocation7 + $0x14] sm:$0xf]
    %v1274 = vld [vmem:[#allocation7 + $0x18] sm:$0xf]
    %v1275 = vld [vmem:[#allocation7 + $0x1c] sm:$0xf]
    %v1276 = vld [vmem:[#allocation7 + $0x20] sm:$0xf]
    %v1277 = vld [vmem:[#allocation7 + $0x24] sm:$0xf]
    %v1278 = vld [vmem:[#allocation7 + $0x28] sm:$0xf]
    %v1279 = vld [vmem:[#allocation7 + $0x2c] sm:$0xf]
    %v1280 = vld [vmem:[#allocation7 + $0x30] sm:$0xf]
    %v1281 = vld [vmem:[#allocation7 + $0x34] sm:$0xf]
    %v1282 = vld [vmem:[#allocation7 + $0x38] sm:$0xf]
    %v1283 = vld [vmem:[#allocation7 + $0x3c] sm:$0xf]
    %v1284 = vld [vmem:[#allocation7 + $0x40] sm:$0xf]
    %v1285 = vld [vmem:[#allocation7 + $0x44] sm:$0xf]
    %v1286 = vld [vmem:[#allocation7 + $0x48] sm:$0xf]
    %v1287 = vld [vmem:[#allocation7 + $0x4c] sm:$0xf]
    %v1288 = vld [vmem:[#allocation7 + $0x50] sm:$0xf]
    %v1289 = vld [vmem:[#allocation7 + $0x54] sm:$0xf]
    %v1290 = vld [vmem:[#allocation7 + $0x58] sm:$0xf]
    %v1291 = vld [vmem:[#allocation7 + $0x5c] sm:$0xf]
    %v1292 = vld [vmem:[#allocation7 + $0x60] sm:$0xf]
    %v1293 = vld [vmem:[#allocation7 + $0x64] sm:$0xf]
    %v1294 = vld [vmem:[#allocation7 + $0x68] sm:$0xf]
    %v1295 = vld [vmem:[#allocation7 + $0x6c] sm:$0xf]
    %v1296 = vld [vmem:[#allocation7 + $0x70] sm:$0xf]
    %v1297 = vld [vmem:[#allocation7 + $0x74] sm:$0xf]
    %v1298 = vld [vmem:[#allocation7 + $0x78] sm:$0xf]
    %v1299 = vld [vmem:[#allocation7 + $0x7c] sm:$0xf]
    %v1300 = vld [vmem:[%s4] sm:$0x1]
    %v1302 = vlaneseq
    %v1303 = vshrl.u32 %v1302, 7
    %v1304 = vsub.s32 0, %v1303
    %v1305 = vrot.slane %v1300, %v1304
    %v1339 = vunpack.c.l.b16 %v1268
    %v1340 = vunpack.c.l.b16 %v1269
    %v1341 = vunpack.c.l.b16 %v1270
    %v1342 = vunpack.c.l.b16 %v1271
    %v1343 = vunpack.c.l.b16 %v1272
    %v1344 = vunpack.c.l.b16 %v1273
    %v1345 = vunpack.c.l.b16 %v1274
    %v1346 = vunpack.c.l.b16 %v1275
    %v1347 = vunpack.c.l.b16 %v1276
    %v1348 = vunpack.c.l.b16 %v1277
    %v1349 = vunpack.c.l.b16 %v1278
    %v1350 = vunpack.c.l.b16 %v1279
    %v1351 = vunpack.c.l.b16 %v1280
    %v1352 = vunpack.c.l.b16 %v1281
    %v1353 = vunpack.c.l.b16 %v1282
    %v1354 = vunpack.c.l.b16 %v1283
    %v1355 = vunpack.c.l.b16 %v1284
    %v1356 = vunpack.c.l.b16 %v1285
    %v1357 = vunpack.c.l.b16 %v1286
    %v1358 = vunpack.c.l.b16 %v1287
    %v1359 = vunpack.c.l.b16 %v1288
    %v1360 = vunpack.c.l.b16 %v1289
    %v1361 = vunpack.c.l.b16 %v1290
    %v1362 = vunpack.c.l.b16 %v1291
    %v1363 = vunpack.c.l.b16 %v1292
    %v1364 = vunpack.c.l.b16 %v1293
    %v1365 = vunpack.c.l.b16 %v1294
    %v1366 = vunpack.c.l.b16 %v1295
    %v1367 = vunpack.c.l.b16 %v1296
    %v1368 = vunpack.c.l.b16 %v1297
    %v1369 = vunpack.c.l.b16 %v1298
    %v1370 = vunpack.c.l.b16 %v1299
    %v1371 = vpack.c.b16 %v1340, %v1339
    %v1372 = vpack.c.b16 %v1342, %v1341
    %v1373 = vpack.c.b16 %v1344, %v1343
    %v1374 = vpack.c.b16 %v1346, %v1345
    %v1375 = vpack.c.b16 %v1348, %v1347
    %v1376 = vpack.c.b16 %v1350, %v1349
    %v1377 = vpack.c.b16 %v1352, %v1351
    %v1378 = vpack.c.b16 %v1354, %v1353
    %v1379 = vpack.c.b16 %v1356, %v1355
    %v1380 = vpack.c.b16 %v1358, %v1357
    %v1381 = vpack.c.b16 %v1360, %v1359
    %v1382 = vpack.c.b16 %v1362, %v1361
    %v1383 = vpack.c.b16 %v1364, %v1363
    %v1384 = vpack.c.b16 %v1366, %v1365
    %v1385 = vpack.c.b16 %v1368, %v1367
    %v1386 = vpack.c.b16 %v1370, %v1369
    %1403 = vmatprep.subr.bf16.mxu0 0
    %1404 = vmatpush1.bf16.msra.mxu0 %v1371
    %1405 = vmatprep.subr.bf16.mxu0 0
    %1406 = vmatpush1.bf16.msra.mxu0 %v1372
    %1407 = vmatprep.subr.bf16.mxu0 0
    %1408 = vmatpush1.bf16.msra.mxu0 %v1373
    %1409 = vmatprep.subr.bf16.mxu0 0
    %1410 = vmatpush1.bf16.msra.mxu0 %v1374
    %1411 = vmatprep.subr.bf16.mxu0 0
    %1412 = vmatpush1.bf16.msra.mxu0 %v1375
    %1413 = vmatprep.subr.bf16.mxu0 0
    %1414 = vmatpush1.bf16.msra.mxu0 %v1376
    %1415 = vmatprep.subr.bf16.mxu0 0
    %1416 = vmatpush1.bf16.msra.mxu0 %v1377
    %1417 = vmatprep.subr.bf16.mxu0 0
    %1418 = vmatpush1.bf16.msra.mxu0 %v1378
    %1419 = vmatprep.subr.bf16.mxu0 0
    %1420 = vmatpush1.bf16.msra.mxu0 %v1379
    %1421 = vmatprep.subr.bf16.mxu0 0
    %1422 = vmatpush1.bf16.msra.mxu0 %v1380
    %1423 = vmatprep.subr.bf16.mxu0 0
    %1424 = vmatpush1.bf16.msra.mxu0 %v1381
    %1425 = vmatprep.subr.bf16.mxu0 0
    %1426 = vmatpush1.bf16.msra.mxu0 %v1382
    %1427 = vmatprep.subr.bf16.mxu0 0
    %1428 = vmatpush1.bf16.msra.mxu0 %v1383
    %1429 = vmatprep.subr.bf16.mxu0 0
    %1430 = vmatpush1.bf16.msra.mxu0 %v1384
    %1431 = vmatprep.subr.bf16.mxu0 0
    %1432 = vmatpush1.bf16.msra.mxu0 %v1385
    %1433 = vmatprep.subr.bf16.mxu0 0
    %1434 = vmatpush1.bf16.msra.mxu0 %v1386
    %1435 = vmatprep.mubr.bf16.mxu0 %v1267
    %1436 = vmatmul.mubr.bf16.gmra.mrb[0].mxu0 %v1266
    %v1437 = vpop.f32.mrb[0].mxu0
    %v1438 = vadd.f32 %v1305, %v1437
    %v1439 = vpop.f32.mrb[0].mxu0
    %v1440 = vpop.f32.mrb[0].mxu0
    %v1441 = vpop.f32.mrb[0].mxu0
    %1442 = vdwg.mxu0
    %v1443 = vmax.f32 %v1438, 0.0
    %v1444 = vpack.c.bf16 %v1443, %v1443
    %v1445 = vld [vmem:[%s5] sm:$0xf]
    %v1446 = vld [vmem:[%s5 + $0x4] sm:$0xf]
    %v1447 = vld [vmem:[%s5 + $0x8] sm:$0xf]
    %v1448 = vld [vmem:[%s5 + $0xc] sm:$0xf]
    %v1449 = vld [vmem:[%s5 + $0x10] sm:$0xf]
    %v1450 = vld [vmem:[%s5 + $0x14] sm:$0xf]
    %v1451 = vld [vmem:[%s5 + $0x18] sm:$0xf]
    %v1452 = vld [vmem:[%s5 + $0x1c] sm:$0xf]
    %v1453 = vld [vmem:[%s5 + $0x20] sm:$0xf]
    %v1454 = vld [vmem:[%s5 + $0x24] sm:$0xf]
    %v1455 = vld [vmem:[%s5 + $0x28] sm:$0xf]
    %v1456 = vld [vmem:[%s5 + $0x2c] sm:$0xf]
    %v1457 = vld [vmem:[%s5 + $0x30] sm:$0xf]
    %v1458 = vld [vmem:[%s5 + $0x34] sm:$0xf]
    %v1459 = vld [vmem:[%s5 + $0x38] sm:$0xf]
    %v1460 = vld [vmem:[%s5 + $0x3c] sm:$0xf]
    %v1461 = vld [vmem:[%s6] sm:$0x1]
    %v1463 = vlaneseq
    %v1464 = vshrl.u32 %v1463, 7
    %v1465 = vsub.s32 0, %v1464
    %v1466 = vrot.slane %v1461, %v1465
    %v1484 = vunpack.c.l.b16 %v1445
    %v1485 = vunpack.c.l.b16 %v1446
    %v1486 = vunpack.c.l.b16 %v1447
    %v1487 = vunpack.c.l.b16 %v1448
    %v1488 = vunpack.c.l.b16 %v1449
    %v1489 = vunpack.c.l.b16 %v1450
    %v1490 = vunpack.c.l.b16 %v1451
    %v1491 = vunpack.c.l.b16 %v1452
    %v1492 = vunpack.c.l.b16 %v1453
    %v1493 = vunpack.c.l.b16 %v1454
    %v1494 = vunpack.c.l.b16 %v1455
    %v1495 = vunpack.c.l.b16 %v1456
    %v1496 = vunpack.c.l.b16 %v1457
    %v1497 = vunpack.c.l.b16 %v1458
    %v1498 = vunpack.c.l.b16 %v1459
    %v1499 = vunpack.c.l.b16 %v1460
    %v1500 = vpack.c.b16 %v1485, %v1484
    %v1501 = vpack.c.b16 %v1487, %v1486
    %v1502 = vpack.c.b16 %v1489, %v1488
    %v1503 = vpack.c.b16 %v1491, %v1490
    %v1504 = vpack.c.b16 %v1493, %v1492
    %v1505 = vpack.c.b16 %v1495, %v1494
    %v1506 = vpack.c.b16 %v1497, %v1496
    %v1507 = vpack.c.b16 %v1499, %v1498
    %1516 = vmatprep.subr.bf16.mxu0 0
    %1517 = vmatpush1.bf16.msra.mxu0 %v1500
    %1518 = vmatprep.subr.bf16.mxu0 0
    %1519 = vmatpush1.bf16.msra.mxu0 %v1501
    %1520 = vmatprep.subr.bf16.mxu0 0
    %1521 = vmatpush1.bf16.msra.mxu0 %v1502
    %1522 = vmatprep.subr.bf16.mxu0 0
    %1523 = vmatpush1.bf16.msra.mxu0 %v1503
    %1524 = vmatprep.subr.bf16.mxu0 0
    %1525 = vmatpush1.bf16.msra.mxu0 %v1504
    %1526 = vmatprep.subr.bf16.mxu0 0
    %1527 = vmatpush1.bf16.msra.mxu0 %v1505
    %1528 = vmatprep.subr.bf16.mxu0 0
    %1529 = vmatpush1.bf16.msra.mxu0 %v1506
    %1530 = vmatprep.subr.bf16.mxu0 0
    %1531 = vmatpush1.bf16.msra.mxu0 %v1507
    %1532 = vmatprep.subr.bf16.mxu0 0
    %1533 = vmatpush1.bf16.msra.mxu0 0
    %1534 = vmatprep.subr.bf16.mxu0 0
    %1535 = vmatpush1.bf16.msra.mxu0 0
    %1536 = vmatprep.subr.bf16.mxu0 0
    %1537 = vmatpush1.bf16.msra.mxu0 0
    %1538 = vmatprep.subr.bf16.mxu0 0
    %1539 = vmatpush1.bf16.msra.mxu0 0
    %1540 = vmatprep.subr.bf16.mxu0 0
    %1541 = vmatpush1.bf16.msra.mxu0 0
    %1542 = vmatprep.subr.bf16.mxu0 0
    %1543 = vmatpush1.bf16.msra.mxu0 0
    %1544 = vmatprep.subr.bf16.mxu0 0
    %1545 = vmatpush1.bf16.msra.mxu0 0
    %1546 = vmatprep.subr.bf16.mxu0 0
    %1547 = vmatpush1.bf16.msra.mxu0 0
    %1548 = vmatprep.mubr.bf16.mxu0 0
    %1549 = vmatmul.mubr.bf16.gmra.mrb[0].mxu0 %v1444
    %v1550 = vpop.f32.mrb[0].mxu0
    %v1551 = vadd.f32 %v1466, %v1550
    %v1552 = vpop.f32.mrb[0].mxu0
    %v1553 = vpop.f32.mrb[0].mxu0
    %v1554 = vpop.f32.mrb[0].mxu0
    %1555 = vdwg.mxu0
    %vm1556 = vcmask 64512
    %1557 = vst.msk [vmem:[#allocation8] sm:$0xff] %vm1556, %v1551
    // Predicated region
    $region42: #{tpu_custom_call.1} parent=1 // pred_check
      _
    $region43: #{tpu_custom_call.1} parent=1 // pred_check_branch
      %1559 = sbr.rel (0) target = $region45
    $region44: #{tpu_custom_call.1} parent=1 // pred_region
      %s1561 = ssub.s32 128, 128
      %1562 = vsyncadd [#allocation4], %s1561
      %s1564 = sshll.u32 [#allocation8], 4
      %s1565 = int_to_ptr.vmem [resolvable:$true] %s1564
      %1567 = dma.vmem_to_hbm [thread:$0]  %s1565, 128, %s7, [#allocation4]
    $region45: #{tpu_custom_call.1} parent=1 // pred_fallthru
      _
    // Predicated region
    $region46: #{tpu_custom_call.1} parent=1 // pred_check
      _
    $region47: #{tpu_custom_call.1} parent=1 // pred_check_branch
      %1569 = sbr.rel (0) target = $region49
    $region48: #{tpu_custom_call.1} parent=1 // pred_region
      %1570 = dma.done [#allocation4], 128
    $region49: #{tpu_custom_call.1} parent=1 // pred_fallthru
      _
    %1571 = vsyncpa [#allocation3], 1
    %1572 = vsyncpa [#allocation6], 1
    %1573 = vsyncpa [#allocation4], 1

</llo_original>
